<compile_context>
chip_gen: v6e
topology: v6e:2x2x1
jax: 0.10.0
libtpu: 0.0.40
codegen_flags: <defaults>
</compile_context>

<pallas_src>
import functools
import math

import jax
import jax.numpy as jnp
from jax import lax
from jax.experimental import pallas as pl
from jax.experimental.pallas import tpu as pltpu


def _round_up(v, m):
    return (v + m - 1) // m * m


def _balanced_tile(dim, max_tile, granule):
    """Largest tile <= max_tile (rounded to `granule`) with balanced blocks.

    Avoids padding a dim just over a tile multiple up to a whole extra tile
    (e.g. dim=300, max_tile=256 -> tile 152, padded 304, instead of 512).
    """
    dim_g = _round_up(dim, granule)
    if dim_g <= max_tile:
        return dim_g
    n_blocks = math.ceil(dim / max_tile)
    return _round_up(math.ceil(dim / n_blocks), granule)


def _fc_kernel(x_ref, w_ref, b_ref, o_ref, acc_ref, *,
               use_activation, tanh_in_f32):
    k = pl.program_id(2)

    @pl.when(k == 0)
    def _init():
        acc_ref[...] = jnp.zeros_like(acc_ref)

    x = x_ref[...]
    if use_activation:
        if tanh_in_f32 and x.dtype != jnp.float32:
            # v5e path for sub-f32 inputs: its EUP has no bf16 support.
            h = jnp.tanh(x.astype(jnp.float32)).astype(x.dtype)
        else:
            # Native-dtype tanh (f32 stays f32, bf16 stays bf16 on v6e/v7x).
            # Recompute per (j, k) rides the otherwise-idle EUP slot.
            h = jnp.tanh(x)
    else:
        h = x

    # Weight tile is (tn, tk) in PyTorch (D_out, D_in) layout: contract the
    # last axes of both operands (h @ W.T) directly on the MXU, f32 accumulate.
    acc_ref[...] += lax.dot_general(
        h, w_ref[...],
        dimension_numbers=(((1,), (1,)), ((), ())),
        preferred_element_type=jnp.float32)

    @pl.when(k == pl.num_programs(2) - 1)
    def _finalize():
        o_ref[...] = (acc_ref[...]
                      + b_ref[...].astype(jnp.float32)).astype(o_ref.dtype)


def fc_layer(x, weight, bias, use_activation=True, *,
             tm=512, tn=512, tk=512,
             tanh_in_f32=False,
             vmem_limit_bytes=None):
    """FCLayer forward: dropout(p=0) -> [tanh] -> x @ weight.T + bias.

    x: (B, D_in); weight: (D_out, D_in) (PyTorch nn.Linear layout); bias: (D_out,).
    """
    B, D_in = x.shape
    D_out, d_in_w = weight.shape
    assert d_in_w == D_in, "weight must be (D_out, D_in)"

    # Balanced effective tiles respecting the (8, 128) layout constraint.
    # tn/tk are lane dims of their blocks -> multiples of 128 (lane-dense
    # output stores); tm is a sublane dim -> multiple of 8.
    tm_e = _balanced_tile(B, tm, 8)
    tn_e = _balanced_tile(D_out, tn, 128)
    tk_e = _balanced_tile(D_in, tk, 128)

    Mp = _round_up(B, tm_e)
    Np = _round_up(D_out, tn_e)
    Kp = _round_up(D_in, tk_e)
    gm, gn, gk = Mp // tm_e, Np // tn_e, Kp // tk_e

    # Zero padding preserves semantics: tanh(0) = 0 and zero weight rows/cols
    # contribute nothing; padded outputs are sliced off below.  For aligned
    # production shapes these pads are no-ops.
    xp = x if (Mp, Kp) == (B, D_in) else jnp.pad(x, ((0, Mp - B), (0, Kp - D_in)))
    wp = (weight if (Np, Kp) == (D_out, D_in)
          else jnp.pad(weight, ((0, Np - D_out), (0, Kp - D_in))))
    bp = (bias if Np == D_out else jnp.pad(bias, (0, Np - D_out))).reshape(1, Np)

    itemsize = jnp.dtype(x.dtype).itemsize
    w_itemsize = jnp.dtype(weight.dtype).itemsize

    if vmem_limit_bytes is None:
        # Double-buffered x/W/out/bias tiles + f32 accumulator, 2x headroom.
        need = (2 * (tm_e * tk_e * itemsize
                     + tn_e * tk_e * w_itemsize
                     + tm_e * tn_e * itemsize
                     + tn_e * itemsize)
                + tm_e * tn_e * 4)
        # >= 32 MiB (lifts v5e's 16 MiB default scoped limit), capped at
        # 48 MiB so it stays safe on v7x's 64 MiB physical per-TC VMEM.
        vmem_limit_bytes = min(max(2 * need, 32 << 20), 48 << 20)

    kernel = functools.partial(
        _fc_kernel,
        use_activation=bool(use_activation),
        tanh_in_f32=bool(tanh_in_f32))

    cost = pl.CostEstimate(
        flops=2 * Mp * Kp * Np,
        # tanh is recomputed once per N tile (gn-fold).
        transcendentals=Mp * Kp * gn if use_activation else 0,
        # Account for re-read factors: x streamed once per N tile, W once per
        # M tile.
        bytes_accessed=(xp.size * itemsize * gn
                        + wp.size * w_itemsize * gm
                        + bp.size * itemsize
                        + Mp * Np * itemsize),
    )

    out_padded = pl.pallas_call(
        kernel,
        out_shape=jax.ShapeDtypeStruct((Mp, Np), x.dtype),
        grid_spec=pltpu.PrefetchScalarGridSpec(
            num_scalar_prefetch=0,
            grid=(gm, gn, gk),
            in_specs=[
                pl.BlockSpec((tm_e, tk_e), lambda i, j, k: (i, k)),   # x
                pl.BlockSpec((tn_e, tk_e), lambda i, j, k: (j, k)),   # W (D_out, D_in)
                pl.BlockSpec((1, tn_e), lambda i, j, k: (0, j)),      # bias
            ],
            out_specs=pl.BlockSpec((tm_e, tn_e), lambda i, j, k: (i, j)),
            scratch_shapes=[pltpu.VMEM((tm_e, tn_e), jnp.float32)],
        ),
        compiler_params=pltpu.CompilerParams(
            # No cross-iteration state besides the K accumulator, so both M
            # and N shard across v7x's two TensorCores.
            dimension_semantics=("parallel", "parallel", "arbitrary"),
            vmem_limit_bytes=vmem_limit_bytes),
        cost_estimate=cost,
    )(xp, wp, bp)

    if (Mp, Np) == (B, D_out):
        return out_padded
    return out_padded[:B, :D_out]


if __name__ == "__main__":
    key = jax.random.PRNGKey(0)
    k_x, k_w, k_b = jax.random.split(key, 3)

    # Small but deliberately non-aligned shapes so the test exercises padding,
    # balanced tiling, a real multi-tile grid with K accumulation, and the
    # bias/downcast finalize.
    batch, input_dim, output_dim = 24, 300, 200

    x = jax.random.normal(k_x, (batch, input_dim), dtype=jnp.float32)

    # nn.Linear init: U(-1/sqrt(in), 1/sqrt(in)).
    bound = 1.0 / (input_dim ** 0.5)
    weight = jax.random.uniform(k_w, (output_dim, input_dim),
                                minval=-bound, maxval=bound, dtype=jnp.float32)
    bias = jax.random.uniform(k_b, (output_dim,),
                              minval=-bound, maxval=bound, dtype=jnp.float32)

    ref_act = jnp.tanh(x) @ weight.T + bias
    ref_lin = x @ weight.T + bias

    # Small tiles -> grid (3, 2, 3): exercises K accumulation across grid steps.
    out = fc_layer(x, weight, bias, use_activation=True, tm=8, tn=128, tk=128)
    out = jax.block_until_ready(out)
    assert out.shape == (batch, output_dim)
    assert jnp.allclose(out, ref_act, atol=5e-4, rtol=5e-4)

    # No-activation path.
    out_na = fc_layer(x, weight, bias, use_activation=False, tm=8, tn=128, tk=128)
    out_na = jax.block_until_ready(out_na)
    assert jnp.allclose(out_na, ref_lin, atol=5e-4, rtol=5e-4)

    # Default (production-sized) tiles also compile and give the same result
    # (grid collapses to (1, 1, 1) at these small shapes).
    out_def = fc_layer(x, weight, bias, use_activation=True)
    out_def = jax.block_until_ready(out_def)
    assert jnp.allclose(out_def, ref_act, atol=5e-4, rtol=5e-4)

    print("KERNEL_OK")
</pallas_src>

<mosaic_0001>
module attributes {stable_mosaic.version = 11 : i64} {
  func.func @_fc_kernel(%arg0: i32, %arg1: i32, %arg2: i32, %arg3: memref<8x128xf32, #tpu.memory_space<vmem>>, %arg4: memref<128x128xf32, #tpu.memory_space<vmem>>, %arg5: memref<1x128xf32, #tpu.memory_space<vmem>>, %arg6: memref<8x128xf32, #tpu.memory_space<vmem>>, %arg7: memref<8x128xf32, #tpu.memory_space<vmem>>) attributes {dimension_semantics = [#tpu.dimension_semantics<parallel>, #tpu.dimension_semantics<parallel>, #tpu.dimension_semantics<arbitrary>], iteration_bounds = array<i64: 3, 2, 3>, scalar_prefetch = 0 : i64, scratch_operands = 1 : i64, tpu.core_type = #tpu.core_type<tc>, window_params = [{transform_indices = @transform_0, window_bounds = array<i64: 8, 128>}, {transform_indices = @transform_1, window_bounds = array<i64: 128, 128>}, {transform_indices = @transform_2, window_bounds = array<i64: 1, 128>}, {transform_indices = @transform_3, window_bounds = array<i64: 8, 128>}]} {
    %c0_i32 = arith.constant 0 : i32
    %0 = arith.cmpi eq, %arg2, %c0_i32 : i32
    %1 = arith.extui %0 : i1 to i32
    %c0_i32_0 = arith.constant 0 : i32
    %2 = arith.cmpi ne, %1, %c0_i32_0 : i32
    scf.if %2 {
      %cst_9 = arith.constant 0.000000e+00 : f32
      %13 = vector.broadcast %cst_9 : f32 to vector<8x128xf32>
      %c0_10 = arith.constant 0 : index
      %c0_11 = arith.constant 0 : index
      %14 = vector.load %arg7[%c0_10, %c0_11] : memref<8x128xf32, #tpu.memory_space<vmem>>, vector<8x128xf32>
      tpu.vector_store %arg7[%c0_10, %c0_11], %13 {strides = array<i32>} : memref<8x128xf32, #tpu.memory_space<vmem>>, vector<8x128xf32>,
    } else {
    }
    %c0 = arith.constant 0 : index
    %c0_1 = arith.constant 0 : index
    %3 = vector.load %arg3[%c0, %c0_1] : memref<8x128xf32, #tpu.memory_space<vmem>>, vector<8x128xf32>
    %4 = math.tanh %3 : vector<8x128xf32>
    %c0_2 = arith.constant 0 : index
    %c0_3 = arith.constant 0 : index
    %5 = vector.load %arg7[%c0_2, %c0_3] : memref<8x128xf32, #tpu.memory_space<vmem>>, vector<8x128xf32>
    %c0_4 = arith.constant 0 : index
    %c0_5 = arith.constant 0 : index
    %6 = vector.load %arg4[%c0_4, %c0_5] : memref<128x128xf32, #tpu.memory_space<vmem>>, vector<128x128xf32>
    %cst = arith.constant dense<0.000000e+00> : vector<8x128xf32>
    %7 = tpu.matmul %4, %6, %cst {dimension_numbers = #tpu.dot_dimension_numbers<[1], [1], [0], [0], [0, 0, 1, 0], [], []>} : vector<8x128xf32>, vector<128x128xf32>, vector<8x128xf32> -> vector<8x128xf32>
    %8 = arith.addf %5, %7 : vector<8x128xf32>
    %c0_6 = arith.constant 0 : index
    %c0_7 = arith.constant 0 : index
    %9 = vector.load %arg7[%c0_6, %c0_7] : memref<8x128xf32, #tpu.memory_space<vmem>>, vector<8x128xf32>
    tpu.vector_store %arg7[%c0_6, %c0_7], %8 {strides = array<i32>} : memref<8x128xf32, #tpu.memory_space<vmem>>, vector<8x128xf32>,
    %c2_i32 = arith.constant 2 : i32
    %10 = arith.cmpi eq, %arg2, %c2_i32 : i32
    %11 = arith.extui %10 : i1 to i32
    %c0_i32_8 = arith.constant 0 : i32
    %12 = arith.cmpi ne, %11, %c0_i32_8 : i32
    scf.if %12 {
      %c0_9 = arith.constant 0 : index
      %c0_10 = arith.constant 0 : index
      %13 = vector.load %arg7[%c0_9, %c0_10] : memref<8x128xf32, #tpu.memory_space<vmem>>, vector<8x128xf32>
      %c0_11 = arith.constant 0 : index
      %c0_12 = arith.constant 0 : index
      %14 = vector.load %arg5[%c0_11, %c0_12] : memref<1x128xf32, #tpu.memory_space<vmem>>, vector<1x128xf32>
      %15 = vector.broadcast %14 : vector<1x128xf32> to vector<8x128xf32>
      %16 = arith.addf %13, %15 : vector<8x128xf32>
      %c0_13 = arith.constant 0 : index
      %c0_14 = arith.constant 0 : index
      %17 = vector.load %arg6[%c0_13, %c0_14] : memref<8x128xf32, #tpu.memory_space<vmem>>, vector<8x128xf32>
      tpu.vector_store %arg6[%c0_13, %c0_14], %16 {strides = array<i32>} : memref<8x128xf32, #tpu.memory_space<vmem>>, vector<8x128xf32>,
    } else {
    }
    return
  }
  func.func @transform_0(%arg0: i32, %arg1: i32, %arg2: i32) -> (i32, i32) {
    %c0_i32 = arith.constant 0 : i32
    return %arg0, %arg2 : i32, i32
  }
  func.func @transform_1(%arg0: i32, %arg1: i32, %arg2: i32) -> (i32, i32) {
    %c0_i32 = arith.constant 0 : i32
    return %arg1, %arg2 : i32, i32
  }
  func.func @transform_2(%arg0: i32, %arg1: i32, %arg2: i32) -> (i32, i32) {
    %c0_i32 = arith.constant 0 : i32
    %c0_i32_0 = arith.constant 0 : i32
    return %c0_i32, %arg1 : i32, i32
  }
  func.func @transform_3(%arg0: i32, %arg1: i32, %arg2: i32) -> (i32, i32) {
    %c0_i32 = arith.constant 0 : i32
    return %arg0, %arg1 : i32, i32
  }
}

</mosaic_0001>

<llo_original>
// kernel: tpu_custom_call.1
$region0: #{tpu_custom_call.1}
  #allocation0 [shape = 'u32[]', space=smem, size = 0x4, offset = 0x4, fixed_abs, tag = 'smem constant byte address 0x4 - core index']
  #allocation1 [shape = 'u32[144,128]{1,0:T(1,128)}', space=vmem, size = 0x12000, scoped, tag = 'internal scratch']
  #allocation2 [shape = 'f32[8,128]{1,0:T(8,128)}', space=vmem, size = 0x1000, scoped, tag = 'scratch operand']
  %s0 = inlined_call_operand.hbm [shape: f32[24,384], index: 0, kind: input, shape index: {}]
  %s1 = inlined_call_operand.hbm [shape: f32[256,384], index: 1, kind: input, shape index: {}]
  %s2 = inlined_call_operand.vmem [shape: f32[1,256], index: 2, kind: input, shape index: {}]
  %s3 = inlined_call_operand.hbm [shape: f32[24,256], index: 3, kind: output, shape index: {}]
  %s4 = sld [smem:[#allocation0]]
  $region61: #{tpu_custom_call.1} parent=0
    _
  %s6 = ssub.s32 1, %s4
  %s7 = scalar_select 0, %s6, %s4
  $region1: #{tpu_custom_call.1} parent=0
    #allocation3 [shape = 'u8[8192]{0}', space=vmem, size = 0x2000, scoped, tag = 'input window, operand 0']
    #allocation4 [shape = 's32[2]{0}', space=sflag, size = 0x8, scoped, tag = 'scoped memory for tpu_custom_call.1']
    #allocation5 [shape = 's32[2]{0}', space=sflag, size = 0x8, scoped, tag = 'scoped memory for tpu_custom_call.1']
    #allocation6 [shape = 'u8[131072]{0}', space=vmem, size = 0x20000, scoped, tag = 'input window, operand 1']
    #allocation7 [shape = 's32[2]{0}', space=sflag, size = 0x8, scoped, tag = 'scoped memory for tpu_custom_call.1']
    #allocation8 [shape = 'u8[8192]{0}', space=vmem, size = 0x2000, scoped, tag = 'output window, operand 0']
    %8 = vsyncpa [#allocation4], 0
    %s9 = scalar_lea.sflag [#allocation4], 1
    %10 = vsyncpa %s9, 0
    %11 = vsyncpa [#allocation7], 0
    %s12 = scalar_lea.sflag [#allocation7], 1
    %13 = vsyncpa %s12, 0
    %14 = vsyncpa [#allocation5], 0
    %s15 = scalar_lea.sflag [#allocation5], 1
    %16 = vsyncpa %s15, 0
    loop: start=0, step=1, limit=20
    $region2: #{tpu_custom_call.1} parent=1 // loop_pre_header
      _
    $region3: #{tpu_custom_call.1} parent=1 // loop_header
      %s18 = sphi 0, %s22
      %p19 = scmp.ge.s32.totalorder %s18, 20
      %s25 = sphi 0, %s44
      %s26 = sphi 0, %s40
      %s27 = sphi 0, %s36
      %s28 = sphi 0, %s25
      %s29 = sphi 0, %s26
      %s30 = sphi 0, %s27
      %s31 = sphi 0, %s28
      %s32 = sphi 0, %s29
      %s33 = sphi 0, %s30
      %s49 = sphi 0, %s51
      %s52 = sphi 0, %s49
      %s53 = sphi 0, %s52
      %s69 = sphi 0, %s53
      %s77 = sphi 0, %s79
      %s80 = sphi 0, %s77
      %s81 = sphi 0, %s80
      %s97 = sphi 0, %s81
      %s103 = sphi 0, %s105
      %s106 = sphi 0, %s103
      %s107 = sphi 0, %s106
      %s123 = sphi 0, %s107
      %s131 = sphi 0, %s133
      %s134 = sphi 0, %s131
      %s135 = sphi 0, %s134
      %s151 = sphi 0, %s135
    $region4: #{tpu_custom_call.1} parent=1 // loop_header_branch
      %21 = sbr.rel (%p19) target = $region8
    $region5: #{tpu_custom_call.1} parent=1 // loop_body
      %s23 = ssub.s32 %s18, 1
      %s24 = ssub.s32 %s18, 2
      %s34 = sadd.s32 1, %s27
      %p35 = scmp.ge.s32.totalorder %s34, 3
      %s36 = scalar_select %p35, 0, %s34
      %s37 = sadd.s32 1, %s26
      %s38 = scalar_select %p35, %s37, %s26
      %p39 = scmp.ge.s32.totalorder %s38, 2
      %s40 = scalar_select %p39, 0, %s38
      %s41 = sadd.s32 1, %s25
      %s42 = scalar_select %p39, %s41, %s25
      %p43 = scmp.ge.s32.totalorder %s42, 3
      %s44 = scalar_select %p43, 0, %s42
      %s45 = ssub.s32 %s25, %s44
      %s46 = ssub.s32 %s27, %s36
      %s47 = sor.u32 %s45, %s46
      %p48 = scmp.eq.s32.totalorder %s47, 0
      %s50 = sadd.s32 %s49, 1
      %s51 = scalar_select %p48, %s49, %s50
      %p54 = pneg %p48
      %p55 = scmp.eq.s32.totalorder %s18, 17
      %p56 = por %p54, %p55
      %p57 = scmp.ne.s32.totalorder %s49, %s52
      %p58 = scmp.eq.s32.totalorder %s18, 0
      %p59 = por %p57, %p58
      %p60 = scmp.ne.s32.totalorder %s49, %s52
      %p61 = scmp.eq.s32.totalorder %s23, 17
      %p62 = por %p60, %p61
      %p63 = scmp.ne.s32.totalorder %s52, %s53
      %p64 = scmp.eq.s32.totalorder %s23, 0
      %p65 = por %p63, %p64
      %p66 = scmp.ne.s32.totalorder %s52, %s53
      %p67 = scmp.eq.s32.totalorder %s24, 17
      %p68 = por %p66, %p67
      %p70 = scmp.ne.s32.totalorder %s53, %s69
      %p71 = scmp.eq.s32.totalorder %s24, 0
      %p72 = por %p70, %p71
      %s73 = ssub.s32 %s26, %s40
      %s74 = ssub.s32 %s27, %s36
      %s75 = sor.u32 %s73, %s74
      %p76 = scmp.eq.s32.totalorder %s75, 0
      %s78 = sadd.s32 %s77, 1
      %s79 = scalar_select %p76, %s77, %s78
      %p82 = pneg %p76
      %p83 = scmp.eq.s32.totalorder %s18, 17
      %p84 = por %p82, %p83
      %p85 = scmp.ne.s32.totalorder %s77, %s80
      %p86 = scmp.eq.s32.totalorder %s18, 0
      %p87 = por %p85, %p86
      %p88 = scmp.ne.s32.totalorder %s77, %s80
      %p89 = scmp.eq.s32.totalorder %s23, 17
      %p90 = por %p88, %p89
      %p91 = scmp.ne.s32.totalorder %s80, %s81
      %p92 = scmp.eq.s32.totalorder %s23, 0
      %p93 = por %p91, %p92
      %p94 = scmp.ne.s32.totalorder %s80, %s81
      %p95 = scmp.eq.s32.totalorder %s24, 17
      %p96 = por %p94, %p95
      %p98 = scmp.ne.s32.totalorder %s81, %s97
      %p99 = scmp.eq.s32.totalorder %s24, 0
      %p100 = por %p98, %p99
      %s101 = ssub.s32 %s26, %s40
      %p102 = scmp.eq.s32.totalorder %s101, 0
      %s104 = sadd.s32 %s103, 1
      %s105 = scalar_select %p102, %s103, %s104
      %p108 = pneg %p102
      %p109 = scmp.eq.s32.totalorder %s18, 17
      %p110 = por %p108, %p109
      %p111 = scmp.ne.s32.totalorder %s103, %s106
      %p112 = scmp.eq.s32.totalorder %s18, 0
      %p113 = por %p111, %p112
      %p114 = scmp.ne.s32.totalorder %s103, %s106
      %p115 = scmp.eq.s32.totalorder %s23, 17
      %p116 = por %p114, %p115
      %p117 = scmp.ne.s32.totalorder %s106, %s107
      %p118 = scmp.eq.s32.totalorder %s23, 0
      %p119 = por %p117, %p118
      %p120 = scmp.ne.s32.totalorder %s106, %s107
      %p121 = scmp.eq.s32.totalorder %s24, 17
      %p122 = por %p120, %p121
      %p124 = scmp.ne.s32.totalorder %s107, %s123
      %p125 = scmp.eq.s32.totalorder %s24, 0
      %p126 = por %p124, %p125
      %s127 = ssub.s32 %s25, %s44
      %s128 = ssub.s32 %s26, %s40
      %s129 = sor.u32 %s127, %s128
      %p130 = scmp.eq.s32.totalorder %s129, 0
      %s132 = sadd.s32 %s131, 1
      %s133 = scalar_select %p130, %s131, %s132
      %p136 = pneg %p130
      %p137 = scmp.eq.s32.totalorder %s18, 17
      %p138 = por %p136, %p137
      %p139 = scmp.ne.s32.totalorder %s131, %s134
      %p140 = scmp.eq.s32.totalorder %s18, 0
      %p141 = por %p139, %p140
      %p142 = scmp.ne.s32.totalorder %s131, %s134
      %p143 = scmp.eq.s32.totalorder %s23, 17
      %p144 = por %p142, %p143
      %p145 = scmp.ne.s32.totalorder %s134, %s135
      %p146 = scmp.eq.s32.totalorder %s23, 0
      %p147 = por %p145, %p146
      %p148 = scmp.ne.s32.totalorder %s134, %s135
      %p149 = scmp.eq.s32.totalorder %s24, 17
      %p150 = por %p148, %p149
      %p152 = scmp.ne.s32.totalorder %s135, %s151
      %p153 = scmp.eq.s32.totalorder %s24, 0
      %p154 = por %p152, %p153
      %p155 = scmp.le.s32.totalorder 1, %s18
      %p156 = scmp.lt.s32.totalorder %s18, 19
      %p157 = pnand %p155, %p156
      %p158 = pneg %p157
      // Predicated region
      $region9: #{tpu_custom_call.1} parent=5 // pred_check
        _
      $region10: #{tpu_custom_call.1} parent=5 // pred_check_branch
        %160 = sbr.rel (%p157) target = $region12
      $region11: #{tpu_custom_call.1} parent=5 // pred_region
        %s161 = ssub.s32 %s18, 1
      $region12: #{tpu_custom_call.1} parent=5 // pred_fallthru
        _
      %p162 = scmp.lt.s32.totalorder %s18, 18
      // Predicated region
      $region13: #{tpu_custom_call.1} parent=5 // pred_check
        %p163 = pneg %p162
      $region14: #{tpu_custom_call.1} parent=5 // pred_check_branch
        %165 = sbr.rel (%p163) target = $region16
      $region15: #{tpu_custom_call.1} parent=5 // pred_region
        // Predicated region
        $region17: #{tpu_custom_call.1} parent=15 // pred_check
          %p166 = pneg %p59
        $region18: #{tpu_custom_call.1} parent=15 // pred_check_branch
          %168 = sbr.rel (%p166) target = $region20
        $region19: #{tpu_custom_call.1} parent=15 // pred_region
          %s169 = sand.u32 %s49, 1
          %s170 = scalar_lea.sflag [#allocation4], %s169
          %s171 = sand.u32 %s49, 1
          %s172 = smul.addr %s171, 8
          %s173 = scalar_lea.vmem [#allocation3], %s172
          %s175 = ssub.s32 128, 128
          %176 = vsyncadd %s170, %s175
          %s177 = smul.addr %s25, 3
          %s178 = sadd.s32 %s27, %s177
          %s179 = smul.addr %s178, 128
          %s180 = scalar_lea.hbm %s0, %s179
          %s182 = sshll.u32 %s173, 4
          %s183 = int_to_ptr.vmem [resolvable:$true] %s182
          %185 = dma.hbm_to_vmem [thread:$0]  %s180, 128, %s183, %s170
        $region20: #{tpu_custom_call.1} parent=15 // pred_fallthru
          _
        // Predicated region
        $region21: #{tpu_custom_call.1} parent=15 // pred_check
          %p186 = pneg %p87
        $region22: #{tpu_custom_call.1} parent=15 // pred_check_branch
          %188 = sbr.rel (%p186) target = $region24
        $region23: #{tpu_custom_call.1} parent=15 // pred_region
          %s189 = sand.u32 %s77, 1
          %s190 = scalar_lea.sflag [#allocation7], %s189
          %s191 = sand.u32 %s77, 1
          %s192 = smul.addr %s191, 128
          %s193 = scalar_lea.vmem [#allocation6], %s192
          %s194 = smul.u32 16, %s26
          %s196 = ssub.s32 2048, 2048
          %197 = vsyncadd %s190, %s196
          %s198 = smul.addr %s194, 3
          %s199 = sadd.s32 %s27, %s198
          %s200 = smul.addr %s199, 128
          %s201 = scalar_lea.hbm %s1, %s200
          %s202 = sshll.u32 %s193, 4
          %s203 = int_to_ptr.vmem [resolvable:$true] %s202
          %208 = dma.hbm_to_vmem [thread:$0]  %s201, 2048, %s203, %s190, 384, 128, 8
        $region24: #{tpu_custom_call.1} parent=15 // pred_fallthru
          _
        // Predicated region
        $region25: #{tpu_custom_call.1} parent=15 // pred_check
          %p209 = pneg %p113
        $region26: #{tpu_custom_call.1} parent=15 // pred_check_branch
          %211 = sbr.rel (%p209) target = $region28
        $region27: #{tpu_custom_call.1} parent=15 // pred_region
          %p212 = scmp.lt.s32.totalorder %s26, 1
          %s213 = scalar_select %p212, %s26, 1
          %s214 = scalar_lea.vmem %s2, %s213
        $region28: #{tpu_custom_call.1} parent=15 // pred_fallthru
          _
      $region16: #{tpu_custom_call.1} parent=5 // pred_fallthru
        _
      %p215 = scmp.le.s32.totalorder 1, %s18
      %p216 = scmp.lt.s32.totalorder %s18, 19
      %p217 = pnand %p215, %p216
      %p218 = pneg %p217
      // Predicated region
      $region29: #{tpu_custom_call.1} parent=5 // pred_check
        _
      $region30: #{tpu_custom_call.1} parent=5 // pred_check_branch
        %220 = sbr.rel (%p217) target = $region32
      $region31: #{tpu_custom_call.1} parent=5 // pred_region
        %s221 = ssub.s32 %s18, 1
        %s222 = sand.u32 %s52, 1
        %s223 = scalar_lea.sflag [#allocation4], %s222
        %s224 = sand.u32 %s52, 1
        %s225 = smul.addr %s224, 8
        %s226 = scalar_lea.vmem [#allocation3], %s225
        // Predicated region
        $region33: #{tpu_custom_call.1} parent=31 // pred_check
          %p227 = pneg %p65
        $region34: #{tpu_custom_call.1} parent=31 // pred_check_branch
          %229 = sbr.rel (%p227) target = $region36
        $region35: #{tpu_custom_call.1} parent=31 // pred_region
          %230 = dma.done %s223, 128
        $region36: #{tpu_custom_call.1} parent=31 // pred_fallthru
          _
        %s231 = sand.u32 %s80, 1
        %s232 = scalar_lea.sflag [#allocation7], %s231
        %s233 = sand.u32 %s80, 1
        %s234 = smul.addr %s233, 128
        %s235 = scalar_lea.vmem [#allocation6], %s234
        // Predicated region
        $region37: #{tpu_custom_call.1} parent=31 // pred_check
          %p236 = pneg %p93
        $region38: #{tpu_custom_call.1} parent=31 // pred_check_branch
          %238 = sbr.rel (%p236) target = $region40
        $region39: #{tpu_custom_call.1} parent=31 // pred_region
          %239 = dma.done %s232, 2048
        $region40: #{tpu_custom_call.1} parent=31 // pred_fallthru
          _
        %s240 = sand.u32 %s52, 1
        %s241 = scalar_lea.sflag [#allocation4], %s240
        %s242 = sand.u32 %s52, 1
        %s243 = smul.addr %s242, 8
        %s244 = scalar_lea.vmem [#allocation3], %s243
        %p245 = pneg %p65
        %p246 = pneg %p62
        %s247 = sand.u32 %s80, 1
        %s248 = scalar_lea.sflag [#allocation7], %s247
        %s249 = sand.u32 %s80, 1
        %s250 = smul.addr %s249, 128
        %s251 = scalar_lea.vmem [#allocation6], %s250
        %p252 = pneg %p93
        %p253 = pneg %p90
        %p254 = scmp.lt.s32.totalorder %s29, 1
        %s255 = scalar_select %p254, %s29, 1
        %s256 = scalar_lea.vmem %s2, %s255
        %p257 = pneg %p119
        %p258 = pneg %p116
        %p259 = pneg %p147
        %p260 = pneg %p144
        %s261 = sand.u32 %s134, 1
        %s262 = scalar_lea.sflag [#allocation5], %s261
        %s263 = sand.u32 %s134, 1
        %s264 = smul.addr %s263, 8
        %s265 = scalar_lea.vmem [#allocation8], %s264
        %s266 = smul.u32 16, %s29
        %p267 = scmp.lt.s32.totalorder %s29, 1
        %s268 = scalar_select %p267, %s29, 1
        %s269 = scalar_lea.vmem %s2, %s268
        %p270 = scmp.eq.s32.totalorder %s30, 0
        // Predicated region
        $region41: #{tpu_custom_call.1} parent=31 // pred_check
          %p271 = pneg %p270
        $region42: #{tpu_custom_call.1} parent=31 // pred_check_branch
          %273 = sbr.rel (%p271) target = $region44
        $region43: #{tpu_custom_call.1} parent=31 // pred_region
          %274 = vst [vmem:[#allocation2] sm:$0xff] 0.0
        $region44: #{tpu_custom_call.1} parent=31 // pred_fallthru
          _
        %v275 = vld [vmem:[%s226] sm:$0xff]
        %v276 = vtanh.pop %v275
        %v277 = vld [vmem:[#allocation2] sm:$0xff]
        %v278 = vld [vmem:[%s235] sm:$0xff]
        %v279 = vld [vmem:[%s235 + $0x8] sm:$0xff]
        %v280 = vld [vmem:[%s235 + $0x10] sm:$0xff]
        %v281 = vld [vmem:[%s235 + $0x18] sm:$0xff]
        %v282 = vld [vmem:[%s235 + $0x20] sm:$0xff]
        %v283 = vld [vmem:[%s235 + $0x28] sm:$0xff]
        %v284 = vld [vmem:[%s235 + $0x30] sm:$0xff]
        %v285 = vld [vmem:[%s235 + $0x38] sm:$0xff]
        %v286 = vld [vmem:[%s235 + $0x40] sm:$0xff]
        %v287 = vld [vmem:[%s235 + $0x48] sm:$0xff]
        %v288 = vld [vmem:[%s235 + $0x50] sm:$0xff]
        %v289 = vld [vmem:[%s235 + $0x58] sm:$0xff]
        %v290 = vld [vmem:[%s235 + $0x60] sm:$0xff]
        %v291 = vld [vmem:[%s235 + $0x68] sm:$0xff]
        %v292 = vld [vmem:[%s235 + $0x70] sm:$0xff]
        %v293 = vld [vmem:[%s235 + $0x78] sm:$0xff]
        %294 = vmatprep.subr.mxu0 0.0
        %295 = vmatpush1.xpose.msra.mxu0 %v293
        %296 = vmatprep.subr.mxu0 0.0
        %297 = vmatpush1.xpose.msra.mxu0 %v292
        %298 = vmatprep.subr.mxu0 0.0
        %299 = vmatpush1.xpose.msra.mxu0 %v291
        %300 = vmatprep.subr.mxu0 0.0
        %301 = vmatpush1.xpose.msra.mxu0 %v290
        %302 = vmatprep.subr.mxu0 0.0
        %303 = vmatpush1.xpose.msra.mxu0 %v289
        %304 = vmatprep.subr.mxu0 0.0
        %305 = vmatpush1.xpose.msra.mxu0 %v288
        %306 = vmatprep.subr.mxu0 0.0
        %307 = vmatpush1.xpose.msra.mxu0 %v287
        %308 = vmatprep.subr.mxu0 0.0
        %309 = vmatpush1.xpose.msra.mxu0 %v286
        %310 = vmatprep.subr.mxu0 0.0
        %311 = vmatpush1.xpose.msra.mxu0 %v285
        %312 = vmatprep.subr.mxu0 0.0
        %313 = vmatpush1.xpose.msra.mxu0 %v284
        %314 = vmatprep.subr.mxu0 0.0
        %315 = vmatpush1.xpose.msra.mxu0 %v283
        %316 = vmatprep.subr.mxu0 0.0
        %317 = vmatpush1.xpose.msra.mxu0 %v282
        %318 = vmatprep.subr.mxu0 0.0
        %319 = vmatpush1.xpose.msra.mxu0 %v281
        %320 = vmatprep.subr.mxu0 0.0
        %321 = vmatpush1.xpose.msra.mxu0 %v280
        %322 = vmatprep.subr.mxu0 0.0
        %323 = vmatpush1.xpose.msra.mxu0 %v279
        %324 = vmatprep.subr.mxu0 0.0
        %325 = vmatpush1.xpose.msra.mxu0 %v278
        %326 = vmatprep.subr.mxu0 0.0
        %327 = vmatpush2.xpose.msra.mxu0 0.0
        %328 = vmatprep.subr.mxu0 0.0
        %329 = vmatpush2.xpose.msra.mxu0 0.0
        %330 = vmatprep.subr.mxu0 0.0
        %331 = vmatpush2.xpose.msra.mxu0 0.0
        %332 = vmatprep.subr.mxu0 0.0
        %333 = vmatpush2.xpose.msra.mxu0 0.0
        %334 = vmatprep.subr.mxu0 0.0
        %335 = vmatpush2.xpose.msra.mxu0 0.0
        %336 = vmatprep.subr.mxu0 0.0
        %337 = vmatpush2.xpose.msra.mxu0 0.0
        %338 = vmatprep.subr.mxu0 0.0
        %339 = vmatpush2.xpose.msra.mxu0 0.0
        %340 = vmatprep.subr.mxu0 0.0
        %341 = vmatpush2.xpose.msra.mxu0 0.0
        %342 = vmatprep.subr.mxu0 0.0
        %343 = vmatpush2.xpose.msra.mxu0 0.0
        %344 = vmatprep.subr.mxu0 0.0
        %345 = vmatpush2.xpose.msra.mxu0 0.0
        %346 = vmatprep.subr.mxu0 0.0
        %347 = vmatpush2.xpose.msra.mxu0 0.0
        %348 = vmatprep.subr.mxu0 0.0
        %349 = vmatpush2.xpose.msra.mxu0 0.0
        %350 = vmatprep.subr.mxu0 0.0
        %351 = vmatpush2.xpose.msra.mxu0 0.0
        %352 = vmatprep.subr.mxu0 0.0
        %353 = vmatpush2.xpose.msra.mxu0 0.0
        %354 = vmatprep.subr.mxu0 0.0
        %355 = vmatpush2.xpose.msra.mxu0 0.0
        %356 = vmatprep.subr.mxu0 0.0
        %357 = vmatpush2.xpose.msra.mxu0 0.0
        %358 = vmatprep.mubr.f32.mxu0 0.0
        %359 = vmatmul.mubr.f32.gmra.mxu0 %v276
        %v360 = vpop.f32.mrf.mxu0
        %v361 = vadd.f32 0.0, %v360
        %v362 = vpop.f32.mrf.mxu0
        %363 = vdwg.mxu0
        %v364 = vadd.f32 %v277, %v361
        %365 = vst [vmem:[#allocation2] sm:$0xff] %v364
        %p366 = scmp.eq.s32.totalorder %s30, 2
        // Predicated region
        $region45: #{tpu_custom_call.1} parent=31 // pred_check
          %p367 = pneg %p366
        $region46: #{tpu_custom_call.1} parent=31 // pred_check_branch
          %369 = sbr.rel (%p367) target = $region48
        $region47: #{tpu_custom_call.1} parent=31 // pred_region
          %v370 = vld [vmem:[#allocation2] sm:$0xff]
          %v371 = vld [vmem:[%s269] sm:$0x1]
          %v373 = vlaneseq
          %v374 = vshrl.u32 %v373, 7
          %v375 = vsub.s32 0, %v374
          %v376 = vrot.slane %v371, %v375
          %v378 = vadd.f32 %v370, %v376
          %379 = vst [vmem:[%s265] sm:$0xff] %v378
        $region48: #{tpu_custom_call.1} parent=31 // pred_fallthru
          _
        %s380 = sand.u32 %s134, 1
        %s381 = scalar_lea.sflag [#allocation5], %s380
        %s382 = sand.u32 %s134, 1
        %s383 = smul.addr %s382, 8
        %s384 = scalar_lea.vmem [#allocation8], %s383
        // Predicated region
        $region49: #{tpu_custom_call.1} parent=31 // pred_check
          %p385 = pneg %p144
        $region50: #{tpu_custom_call.1} parent=31 // pred_check_branch
          %387 = sbr.rel (%p385) target = $region52
        $region51: #{tpu_custom_call.1} parent=31 // pred_region
          %s389 = ssub.s32 128, 128
          %390 = vsyncadd %s381, %s389
          %s391 = smul.addr %s28, 2
          %s392 = sadd.s32 %s29, %s391
          %s393 = smul.addr %s392, 128
          %s394 = scalar_lea.hbm %s3, %s393
          %s396 = sshll.u32 %s384, 4
          %s397 = int_to_ptr.vmem [resolvable:$true] %s396
          %399 = dma.vmem_to_hbm [thread:$0]  %s397, 128, %s394, %s381
        $region52: #{tpu_custom_call.1} parent=31 // pred_fallthru
          _
      $region32: #{tpu_custom_call.1} parent=5 // pred_fallthru
        _
      %p400 = scmp.le.s32.totalorder 2, %s18
      // Predicated region
      $region53: #{tpu_custom_call.1} parent=5 // pred_check
        %p401 = pneg %p400
      $region54: #{tpu_custom_call.1} parent=5 // pred_check_branch
        %403 = sbr.rel (%p401) target = $region56
      $region55: #{tpu_custom_call.1} parent=5 // pred_region
        %s404 = ssub.s32 %s18, 2
        // Predicated region
        $region57: #{tpu_custom_call.1} parent=55 // pred_check
          %p405 = pneg %p150
        $region58: #{tpu_custom_call.1} parent=55 // pred_check_branch
          %407 = sbr.rel (%p405) target = $region60
        $region59: #{tpu_custom_call.1} parent=55 // pred_region
          %s408 = sand.u32 %s135, 1
          %s409 = scalar_lea.sflag [#allocation5], %s408
          %s410 = sand.u32 %s135, 1
          %s411 = smul.addr %s410, 8
          %s412 = scalar_lea.vmem [#allocation8], %s411
          %413 = dma.done %s409, 128
        $region60: #{tpu_custom_call.1} parent=55 // pred_fallthru
          _
      $region56: #{tpu_custom_call.1} parent=5 // pred_fallthru
        _
    $region6: #{tpu_custom_call.1} parent=1 // loop_footer
      %s22 = sadd.s32 1, %s18
    $region7: #{tpu_custom_call.1} parent=1 // loop_footer_branch
      %17 = sbr.rel target = $region3
    $region8: #{tpu_custom_call.1} parent=1 // loop_exit
      _
    %414 = vsyncpa [#allocation4], 1
    %s415 = scalar_lea.sflag [#allocation4], 1
    %416 = vsyncpa %s415, 1
    %417 = vsyncpa [#allocation7], 1
    %s418 = scalar_lea.sflag [#allocation7], 1
    %419 = vsyncpa %s418, 1
    %420 = vsyncpa [#allocation5], 1
    %s421 = scalar_lea.sflag [#allocation5], 1
    %422 = vsyncpa %s421, 1

</llo_original>
